<compile_context>
chip_gen: v6e
topology: v6e:2x2x1
jax: 0.10.0
libtpu: 0.0.40
codegen_flags: <defaults>
</compile_context>

<pallas_src>
import jax
import jax.numpy as jnp
from jax.experimental import pallas as pl
from jax.experimental.pallas import tpu as pltpu

_LANE = 128
_SUBLANE = 8


def _round_up(x, m):
    return (x + m - 1) // m * m


def _mlp_kernel(x_ref, w1_ref, b1_ref, w2_ref, b2_ref, o_ref):
    # Cast the x tile to bf16 on-chip (VPU), run both matmuls on the MXU with
    # f32 accumulation; bias add + ReLU stay f32 on the VPU.
    xb = x_ref[...].astype(jnp.bfloat16)
    h = jnp.dot(xb, w1_ref[...], preferred_element_type=jnp.float32)
    h = jnp.maximum(h + b1_ref[...], 0.0)
    o = jnp.dot(h.astype(jnp.bfloat16), w2_ref[...],
                preferred_element_type=jnp.float32)
    o_ref[...] = (o + b2_ref[...]).astype(o_ref.dtype)


def prepare_params(w1, b1, w2, b2):
    """One-time weight prep, hoisted out of the per-call path.

    w1: (in_n, hid), b1: (1, hid) or (hid,),
    w2: (hid, out_n), b2: (1, out_n) or (out_n,)
    Returns ((w1_bf16, b1_f32, w2_bf16_padded, b2_f32_padded), out_n);
    the output feature dim is zero-padded to a multiple of 128 lanes.
    """
    in_n, hid = w1.shape
    out_n = w2.shape[-1]
    out_p = _round_up(out_n, _LANE)
    w1_b = w1.astype(jnp.bfloat16)
    w2_b = jnp.zeros((hid, out_p), jnp.bfloat16).at[:, :out_n].set(
        w2.astype(jnp.bfloat16))
    b1_f = jnp.asarray(b1, jnp.float32).reshape(1, hid)
    b2_f = jnp.zeros((1, out_p), jnp.float32).at[:, :out_n].set(
        jnp.asarray(b2, jnp.float32).reshape(1, out_n))
    return (w1_b, b1_f, w2_b, b2_f), out_n


def my_ann_forward_padded(x, params, *, block_m=1024, out_dtype=jnp.float32,
                          core_parallel=False):
    """Fused MLP forward; returns the lane-dense padded (B, out_p) slab.

    x: (B, in_n) f32, unpadded. params: output of prepare_params().
    Set out_dtype=jnp.bfloat16 to halve output-store HBM traffic, and
    core_parallel=True on v7x to split the batch grid across both TensorCores.
    """
    w1_b, b1_f, w2_b, b2_f = params
    B, in_n = x.shape
    hid = w1_b.shape[1]
    out_p = w2_b.shape[1]

    # Batch tile: multiple of 8 sublanes, capped by block_m. Ragged last block
    # (grid = cdiv) means no batch padding is ever materialized.
    tm = _round_up(min(block_m, _round_up(B, _SUBLANE)), _SUBLANE)
    grid = (pl.cdiv(B, tm),)

    batch_sem = pltpu.CORE_PARALLEL if core_parallel else "parallel"

    return pl.pallas_call(
        _mlp_kernel,
        out_shape=jax.ShapeDtypeStruct((B, out_p), out_dtype),
        grid=grid,
        in_specs=[
            # x streams over the batch axis at its native width (full-extent
            # last dim, no 128-padding needed).
            pl.BlockSpec((tm, in_n), lambda i: (i, 0)),
            # Weights/biases: constant index_map -> fetched once, VMEM-resident.
            pl.BlockSpec((in_n, hid), lambda i: (0, 0)),
            pl.BlockSpec((1, hid), lambda i: (0, 0)),
            pl.BlockSpec((hid, out_p), lambda i: (0, 0)),
            pl.BlockSpec((1, out_p), lambda i: (0, 0)),
        ],
        out_specs=pl.BlockSpec((tm, out_p), lambda i: (i, 0)),
        compiler_params=pltpu.CompilerParams(
            dimension_semantics=(batch_sem,)),
    )(x, w1_b, b1_f, w2_b, b2_f)


def my_ann_forward(x, params, out_n, **kwargs):
    """Forward returning (B, out_n). Jit this so the narrow slice fuses."""
    return my_ann_forward_padded(x, params, **kwargs)[:, :out_n]


def init_params(key, input_n, hidden_n, output_n):
    """Deterministic PyTorch-style (uniform +-1/sqrt(fan_in)) init."""
    k1, k2, k3, k4 = jax.random.split(key, 4)
    bound1 = 1.0 / jnp.sqrt(input_n)
    bound2 = 1.0 / jnp.sqrt(hidden_n)
    w1 = jax.random.uniform(k1, (input_n, hidden_n), jnp.float32, -bound1, bound1)
    b1 = jax.random.uniform(k2, (1, hidden_n), jnp.float32, -bound1, bound1)
    w2 = jax.random.uniform(k3, (hidden_n, output_n), jnp.float32, -bound2, bound2)
    b2 = jax.random.uniform(k4, (1, output_n), jnp.float32, -bound2, bound2)
    return w1, b1, w2, b2


if __name__ == "__main__":
    key = jax.random.PRNGKey(0)
    kx, kp = jax.random.split(key)

    batch = 8
    input_n = 32        # stand-in for X.shape[1]
    hidden_n = 256
    output_n = 3

    x = jax.random.normal(kx, (batch, input_n), jnp.float32)
    w1, b1, w2, b2 = init_params(kp, input_n, hidden_n, output_n)

    # Weight prep done ONCE (not per forward call).
    params, out_n = prepare_params(w1, b1, w2, b2)

    # Jit the full forward so the (B, 128) -> (B, 3) slice fuses with the call.
    fwd = jax.jit(lambda xx: my_ann_forward(xx, params, out_n))
    out = jax.block_until_ready(fwd(x))

    # Reference check in plain JAX (f32). bf16 matmul inputs -> looser tolerance.
    ref = jnp.maximum(x @ w1 + b1, 0.0) @ w2 + b2
    assert out.shape == (batch, output_n)
    assert jnp.allclose(out, ref, atol=2e-2, rtol=2e-2), (
        float(jnp.max(jnp.abs(out - ref))))

    print("KERNEL_OK")
</pallas_src>

<mosaic_0001>
module attributes {stable_mosaic.version = 11 : i64} {
  func.func @_mlp_kernel(%arg0: i32, %arg1: memref<8x32xf32, #tpu.memory_space<vmem>>, %arg2: memref<32x256xbf16, #tpu.memory_space<vmem>>, %arg3: memref<1x256xf32, #tpu.memory_space<vmem>>, %arg4: memref<256x128xbf16, #tpu.memory_space<vmem>>, %arg5: memref<1x128xf32, #tpu.memory_space<vmem>>, %arg6: memref<8x128xf32, #tpu.memory_space<vmem>>) attributes {dimension_semantics = [#tpu.dimension_semantics<parallel>], iteration_bounds = array<i64: 1>, scalar_prefetch = 0 : i64, scratch_operands = 0 : i64, tpu.core_type = #tpu.core_type<tc>, window_params = [{transform_indices = @transform_0, window_bounds = array<i64: 8, 32>}, {pipeline_mode = #tpu.pipeline_mode<synchronous>, transform_indices = @transform_1, window_bounds = array<i64: 32, 256>}, {pipeline_mode = #tpu.pipeline_mode<synchronous>, transform_indices = @transform_2, window_bounds = array<i64: 1, 256>}, {pipeline_mode = #tpu.pipeline_mode<synchronous>, transform_indices = @transform_3, window_bounds = array<i64: 256, 128>}, {pipeline_mode = #tpu.pipeline_mode<synchronous>, transform_indices = @transform_4, window_bounds = array<i64: 1, 128>}, {transform_indices = @transform_5, window_bounds = array<i64: 8, 128>}]} {
    %c0 = arith.constant 0 : index
    %c0_0 = arith.constant 0 : index
    %0 = vector.load %arg1[%c0, %c0_0] : memref<8x32xf32, #tpu.memory_space<vmem>>, vector<8x32xf32>
    %1 = arith.truncf %0 : vector<8x32xf32> to vector<8x32xbf16>
    %c0_1 = arith.constant 0 : index
    %c0_2 = arith.constant 0 : index
    %2 = vector.load %arg2[%c0_1, %c0_2] : memref<32x256xbf16, #tpu.memory_space<vmem>>, vector<32x256xbf16>
    %cst = arith.constant dense<0.000000e+00> : vector<8x256xf32>
    %3 = tpu.matmul %1, %2, %cst {dimension_numbers = #tpu.dot_dimension_numbers<[1], [0], [0], [1], [0, 0, 1, 1], [], []>} : vector<8x32xbf16>, vector<32x256xbf16>, vector<8x256xf32> -> vector<8x256xf32>
    %c0_3 = arith.constant 0 : index
    %c0_4 = arith.constant 0 : index
    %4 = vector.load %arg3[%c0_3, %c0_4] : memref<1x256xf32, #tpu.memory_space<vmem>>, vector<1x256xf32>
    %5 = vector.broadcast %4 : vector<1x256xf32> to vector<8x256xf32>
    %6 = arith.addf %3, %5 : vector<8x256xf32>
    %cst_5 = arith.constant 0.000000e+00 : f32
    %7 = vector.broadcast %cst_5 : f32 to vector<8x256xf32>
    %8 = arith.maximumf %6, %7 : vector<8x256xf32>
    %9 = arith.truncf %8 : vector<8x256xf32> to vector<8x256xbf16>
    %c0_6 = arith.constant 0 : index
    %c0_7 = arith.constant 0 : index
    %10 = vector.load %arg4[%c0_6, %c0_7] : memref<256x128xbf16, #tpu.memory_space<vmem>>, vector<256x128xbf16>
    %cst_8 = arith.constant dense<0.000000e+00> : vector<8x128xf32>
    %11 = tpu.matmul %9, %10, %cst_8 {dimension_numbers = #tpu.dot_dimension_numbers<[1], [0], [0], [1], [0, 0, 1, 1], [], []>} : vector<8x256xbf16>, vector<256x128xbf16>, vector<8x128xf32> -> vector<8x128xf32>
    %c0_9 = arith.constant 0 : index
    %c0_10 = arith.constant 0 : index
    %12 = vector.load %arg5[%c0_9, %c0_10] : memref<1x128xf32, #tpu.memory_space<vmem>>, vector<1x128xf32>
    %13 = vector.broadcast %12 : vector<1x128xf32> to vector<8x128xf32>
    %14 = arith.addf %11, %13 : vector<8x128xf32>
    %c0_11 = arith.constant 0 : index
    %c0_12 = arith.constant 0 : index
    %15 = vector.load %arg6[%c0_11, %c0_12] : memref<8x128xf32, #tpu.memory_space<vmem>>, vector<8x128xf32>
    tpu.vector_store %arg6[%c0_11, %c0_12], %14 {strides = array<i32>} : memref<8x128xf32, #tpu.memory_space<vmem>>, vector<8x128xf32>,
    return
  }
  func.func @transform_0(%arg0: i32) -> (i32, i32) {
    %c0_i32 = arith.constant 0 : i32
    %c0_i32_0 = arith.constant 0 : i32
    return %arg0, %c0_i32 : i32, i32
  }
  func.func @transform_1(%arg0: i32) -> (i32, i32) {
    %c0_i32 = arith.constant 0 : i32
    %c0_i32_0 = arith.constant 0 : i32
    %c0_i32_1 = arith.constant 0 : i32
    return %c0_i32, %c0_i32_0 : i32, i32
  }
  func.func @transform_2(%arg0: i32) -> (i32, i32) {
    %c0_i32 = arith.constant 0 : i32
    %c0_i32_0 = arith.constant 0 : i32
    %c0_i32_1 = arith.constant 0 : i32
    return %c0_i32, %c0_i32_0 : i32, i32
  }
  func.func @transform_3(%arg0: i32) -> (i32, i32) {
    %c0_i32 = arith.constant 0 : i32
    %c0_i32_0 = arith.constant 0 : i32
    %c0_i32_1 = arith.constant 0 : i32
    return %c0_i32, %c0_i32_0 : i32, i32
  }
  func.func @transform_4(%arg0: i32) -> (i32, i32) {
    %c0_i32 = arith.constant 0 : i32
    %c0_i32_0 = arith.constant 0 : i32
    %c0_i32_1 = arith.constant 0 : i32
    return %c0_i32, %c0_i32_0 : i32, i32
  }
  func.func @transform_5(%arg0: i32) -> (i32, i32) {
    %c0_i32 = arith.constant 0 : i32
    %c0_i32_0 = arith.constant 0 : i32
    return %arg0, %c0_i32 : i32, i32
  }
}

</mosaic_0001>

<llo_original>
// kernel: _lambda_.1
$region0: #{_lambda_.1}
  #allocation0 [shape = 'u32[]', space=smem, size = 0x4, offset = 0x4, fixed_abs, tag = 'smem constant byte address 0x4 - core index']
  #allocation1 [shape = 'u32[144,128]{1,0:T(1,128)}', space=vmem, size = 0x12000, scoped, tag = 'internal scratch']
  %s0 = inlined_call_operand.hbm [shape: f32[8,32], index: 0, kind: input, shape index: {}]
  %s1 = inlined_call_operand.hbm [shape: bf16[32,256], index: 1, kind: input, shape index: {}]
  %s2 = inlined_call_operand.vmem [shape: f32[1,256], index: 2, kind: input, shape index: {}]
  %s3 = inlined_call_operand.hbm [shape: bf16[256,128], index: 3, kind: input, shape index: {}]
  %s4 = inlined_call_operand.vmem [shape: f32[1,128], index: 4, kind: input, shape index: {}]
  %s5 = inlined_call_operand.vmem [shape: f32[8,128], index: 5, kind: output, shape index: {}]
  %s6 = sld [smem:[#allocation0]]
  $region42: #{_lambda_.1} parent=0
    _
  %s8 = ssub.s32 1, %s6
  %s9 = scalar_select 0, %s8, %s6
  $region1: #{_lambda_.1} parent=0
    #allocation2 [shape = 'u8[4096]{0}', space=vmem, size = 0x1000, scoped, tag = 'input window, operand 0, single buffered']
    #allocation3 [shape = 's32[1]{0}', space=sflag, size = 0x4, scoped, tag = 'scoped memory for _lambda_.1']
    #allocation4 [shape = 'u8[16384]{0}', space=vmem, size = 0x4000, scoped, tag = 'input window, operand 1, single buffered']
    #allocation5 [shape = 's32[1]{0}', space=sflag, size = 0x4, scoped, tag = 'scoped memory for _lambda_.1']
    #allocation6 [shape = 'u8[65536]{0}', space=vmem, size = 0x10000, scoped, tag = 'input window, operand 3, single buffered']
    %10 = vsyncpa [#allocation3], 0
    %11 = vsyncpa [#allocation5], 0
    // Predicated region
    $region2: #{_lambda_.1} parent=1 // pred_check
      _
    $region3: #{_lambda_.1} parent=1 // pred_check_branch
      %13 = sbr.rel (0) target = $region5
    $region4: #{_lambda_.1} parent=1 // pred_region
      %s15 = ssub.s32 128, 128
      %16 = vsyncadd [#allocation3], %s15
      %s18 = sshll.u32 [#allocation2], 4
      %s19 = int_to_ptr.vmem [resolvable:$true] %s18
      %21 = dma.hbm_to_vmem [thread:$0]  %s0, 128, %s19, [#allocation3]
    $region5: #{_lambda_.1} parent=1 // pred_fallthru
      _
    // Predicated region
    $region6: #{_lambda_.1} parent=1 // pred_check
      _
    $region7: #{_lambda_.1} parent=1 // pred_check_branch
      %23 = sbr.rel (0) target = $region9
    $region8: #{_lambda_.1} parent=1 // pred_region
      %s25 = ssub.s32 512, 512
      %26 = vsyncadd [#allocation5], %s25
      %s27 = sshll.u32 [#allocation4], 4
      %s28 = int_to_ptr.vmem [resolvable:$true] %s27
      %33 = dma.hbm_to_vmem [thread:$0]  %s1, 512, %s28, [#allocation5], 128, 128, 8
    $region9: #{_lambda_.1} parent=1 // pred_fallthru
      _
    // Predicated region
    $region10: #{_lambda_.1} parent=1 // pred_check
      _
    $region11: #{_lambda_.1} parent=1 // pred_check_branch
      %35 = sbr.rel (0) target = $region13
    $region12: #{_lambda_.1} parent=1 // pred_region
      _
    $region13: #{_lambda_.1} parent=1 // pred_fallthru
      _
    // Predicated region
    $region14: #{_lambda_.1} parent=1 // pred_check
      _
    $region15: #{_lambda_.1} parent=1 // pred_check_branch
      %37 = sbr.rel (0) target = $region17
    $region16: #{_lambda_.1} parent=1 // pred_region
      %s39 = ssub.s32 2048, 2048
      %40 = vsyncadd [#allocation5], %s39
      %s41 = sshll.u32 [#allocation6], 4
      %s42 = int_to_ptr.vmem [resolvable:$true] %s41
      %47 = dma.hbm_to_vmem [thread:$0]  %s3, 2048, %s42, [#allocation5], 64, 64, 4
    $region17: #{_lambda_.1} parent=1 // pred_fallthru
      _
    // Predicated region
    $region18: #{_lambda_.1} parent=1 // pred_check
      _
    $region19: #{_lambda_.1} parent=1 // pred_check_branch
      %49 = sbr.rel (0) target = $region21
    $region20: #{_lambda_.1} parent=1 // pred_region
      _
    $region21: #{_lambda_.1} parent=1 // pred_fallthru
      _
    // Predicated region
    $region22: #{_lambda_.1} parent=1 // pred_check
      _
    $region23: #{_lambda_.1} parent=1 // pred_check_branch
      %51 = sbr.rel (0) target = $region25
    $region24: #{_lambda_.1} parent=1 // pred_region
      %52 = dma.done [#allocation3], 128
    $region25: #{_lambda_.1} parent=1 // pred_fallthru
      _
    // Predicated region
    $region26: #{_lambda_.1} parent=1 // pred_check
      _
    $region27: #{_lambda_.1} parent=1 // pred_check_branch
      %54 = sbr.rel (0) target = $region29
    $region28: #{_lambda_.1} parent=1 // pred_region
      %55 = dma.done [#allocation5], 512
    $region29: #{_lambda_.1} parent=1 // pred_fallthru
      _
    // Predicated region
    $region30: #{_lambda_.1} parent=1 // pred_check
      _
    $region31: #{_lambda_.1} parent=1 // pred_check_branch
      %57 = sbr.rel (0) target = $region33
    $region32: #{_lambda_.1} parent=1 // pred_region
      %58 = dma.done [#allocation5], 2048
    $region33: #{_lambda_.1} parent=1 // pred_fallthru
      _
    %v60 = vld [vmem:[#allocation2] sm:$0xff]
    %v61 = vpack.c.bf16 %v60, %v60
    %v62 = vld [vmem:[#allocation4] sm:$0xff]
    %v63 = vld [vmem:[#allocation4 + $0x8] sm:$0xff]
    %v64 = vld [vmem:[#allocation4 + $0x10] sm:$0xff]
    %v65 = vld [vmem:[#allocation4 + $0x18] sm:$0xff]
    %v66 = vld [vmem:[%s2] sm:$0x3]
    %v68 = vlaneseq
    %v69 = vshrl.u32 %v68, 7
    %v70 = vsub.s32 0, %v69
    %v71 = vrot.slane %v66, %v70
    %v72 = vlaneseq
    %v73 = vshrl.u32 %v72, 7
    %v74 = vsub.s32 1, %v73
    %v75 = vrot.slane %v66, %v74
    %v82 = vunpack.c.l.b16 %v62
    %v83 = vunpack.c.h.b16 %v62
    %v84 = vunpack.c.l.b16 %v63
    %v85 = vunpack.c.h.b16 %v63
    %v86 = vunpack.c.l.b16 %v64
    %v87 = vunpack.c.h.b16 %v64
    %v88 = vunpack.c.l.b16 %v65
    %v89 = vunpack.c.h.b16 %v65
    %v90 = vpack.c.b16 %v84, %v82
    %v91 = vpack.c.b16 %v85, %v83
    %v92 = vpack.c.b16 %v88, %v86
    %v93 = vpack.c.b16 %v89, %v87
    %vm98 = vcmask 261120
    %v100 = vsel %vm98, %v61, 0
    %102 = vmatprep.subr.bf16.mxu0 0
    %103 = vmatpush1.bf16.msra.mxu0 0
    %104 = vmatprep.subr.bf16.mxu0 0
    %105 = vmatpush1.bf16.msra.mxu0 0
    %106 = vmatprep.subr.bf16.mxu0 0
    %107 = vmatpush1.bf16.msra.mxu0 0
    %108 = vmatprep.subr.bf16.mxu0 0
    %109 = vmatpush1.bf16.msra.mxu0 0
    %110 = vmatprep.subr.bf16.mxu0 0
    %111 = vmatpush1.bf16.msra.mxu0 0
    %112 = vmatprep.subr.bf16.mxu0 0
    %113 = vmatpush1.bf16.msra.mxu0 0
    %114 = vmatprep.subr.bf16.mxu0 %v93
    %115 = vmatpush1.bf16.msra.mxu0 %v92
    %116 = vmatprep.subr.bf16.mxu0 %v91
    %117 = vmatpush1.bf16.msra.mxu0 %v90
    %118 = vmatprep.subr.bf16.mxu0 0
    %119 = vmatpush2.bf16.msra.mxu0 0
    %120 = vmatprep.subr.bf16.mxu0 0
    %121 = vmatpush2.bf16.msra.mxu0 0
    %122 = vmatprep.subr.bf16.mxu0 0
    %123 = vmatpush2.bf16.msra.mxu0 0
    %124 = vmatprep.subr.bf16.mxu0 0
    %125 = vmatpush2.bf16.msra.mxu0 0
    %126 = vmatprep.subr.bf16.mxu0 0
    %127 = vmatpush2.bf16.msra.mxu0 0
    %128 = vmatprep.subr.bf16.mxu0 0
    %129 = vmatpush2.bf16.msra.mxu0 0
    %130 = vmatprep.subr.bf16.mxu0 0
    %131 = vmatpush2.bf16.msra.mxu0 0
    %132 = vmatprep.subr.bf16.mxu0 0
    %133 = vmatpush2.bf16.msra.mxu0 0
    %134 = vmatprep.mubr.bf16.mxu0 0
    %135 = vmatmul.mubr.bf16.gmra.mxu0 %v100
    %v136 = vpop.f32.mrf.mxu0
    %v137 = vadd.f32 %v71, %v136
    %v138 = vpop.f32.mrf.mxu0
    %v139 = vadd.f32 %v75, %v138
    %v140 = vpop.f32.mrf.mxu0
    %v141 = vpop.f32.mrf.mxu0
    %142 = vdwg.mxu0
    %v143 = vmax.f32 %v137, 0.0
    %v144 = vmax.f32 %v139, 0.0
    %v145 = vpack.c.bf16 %v143, %v143
    %v146 = vpack.c.bf16 %v144, %v144
    %v147 = vld [vmem:[#allocation6] sm:$0xf]
    %v148 = vld [vmem:[#allocation6 + $0x4] sm:$0xf]
    %v149 = vld [vmem:[#allocation6 + $0x8] sm:$0xf]
    %v150 = vld [vmem:[#allocation6 + $0xc] sm:$0xf]
    %v151 = vld [vmem:[#allocation6 + $0x10] sm:$0xf]
    %v152 = vld [vmem:[#allocation6 + $0x14] sm:$0xf]
    %v153 = vld [vmem:[#allocation6 + $0x18] sm:$0xf]
    %v154 = vld [vmem:[#allocation6 + $0x1c] sm:$0xf]
    %v155 = vld [vmem:[#allocation6 + $0x20] sm:$0xf]
    %v156 = vld [vmem:[#allocation6 + $0x24] sm:$0xf]
    %v157 = vld [vmem:[#allocation6 + $0x28] sm:$0xf]
    %v158 = vld [vmem:[#allocation6 + $0x2c] sm:$0xf]
    %v159 = vld [vmem:[#allocation6 + $0x30] sm:$0xf]
    %v160 = vld [vmem:[#allocation6 + $0x34] sm:$0xf]
    %v161 = vld [vmem:[#allocation6 + $0x38] sm:$0xf]
    %v162 = vld [vmem:[#allocation6 + $0x3c] sm:$0xf]
    %v163 = vld [vmem:[#allocation6 + $0x40] sm:$0xf]
    %v164 = vld [vmem:[#allocation6 + $0x44] sm:$0xf]
    %v165 = vld [vmem:[#allocation6 + $0x48] sm:$0xf]
    %v166 = vld [vmem:[#allocation6 + $0x4c] sm:$0xf]
    %v167 = vld [vmem:[#allocation6 + $0x50] sm:$0xf]
    %v168 = vld [vmem:[#allocation6 + $0x54] sm:$0xf]
    %v169 = vld [vmem:[#allocation6 + $0x58] sm:$0xf]
    %v170 = vld [vmem:[#allocation6 + $0x5c] sm:$0xf]
    %v171 = vld [vmem:[#allocation6 + $0x60] sm:$0xf]
    %v172 = vld [vmem:[#allocation6 + $0x64] sm:$0xf]
    %v173 = vld [vmem:[#allocation6 + $0x68] sm:$0xf]
    %v174 = vld [vmem:[#allocation6 + $0x6c] sm:$0xf]
    %v175 = vld [vmem:[#allocation6 + $0x70] sm:$0xf]
    %v176 = vld [vmem:[#allocation6 + $0x74] sm:$0xf]
    %v177 = vld [vmem:[#allocation6 + $0x78] sm:$0xf]
    %v178 = vld [vmem:[#allocation6 + $0x7c] sm:$0xf]
    %v179 = vld [vmem:[%s4] sm:$0x1]
    %v181 = vlaneseq
    %v182 = vshrl.u32 %v181, 7
    %v183 = vsub.s32 0, %v182
    %v184 = vrot.slane %v179, %v183
    %v218 = vunpack.c.l.b16 %v147
    %v219 = vunpack.c.l.b16 %v148
    %v220 = vunpack.c.l.b16 %v149
    %v221 = vunpack.c.l.b16 %v150
    %v222 = vunpack.c.l.b16 %v151
    %v223 = vunpack.c.l.b16 %v152
    %v224 = vunpack.c.l.b16 %v153
    %v225 = vunpack.c.l.b16 %v154
    %v226 = vunpack.c.l.b16 %v155
    %v227 = vunpack.c.l.b16 %v156
    %v228 = vunpack.c.l.b16 %v157
    %v229 = vunpack.c.l.b16 %v158
    %v230 = vunpack.c.l.b16 %v159
    %v231 = vunpack.c.l.b16 %v160
    %v232 = vunpack.c.l.b16 %v161
    %v233 = vunpack.c.l.b16 %v162
    %v234 = vunpack.c.l.b16 %v163
    %v235 = vunpack.c.l.b16 %v164
    %v236 = vunpack.c.l.b16 %v165
    %v237 = vunpack.c.l.b16 %v166
    %v238 = vunpack.c.l.b16 %v167
    %v239 = vunpack.c.l.b16 %v168
    %v240 = vunpack.c.l.b16 %v169
    %v241 = vunpack.c.l.b16 %v170
    %v242 = vunpack.c.l.b16 %v171
    %v243 = vunpack.c.l.b16 %v172
    %v244 = vunpack.c.l.b16 %v173
    %v245 = vunpack.c.l.b16 %v174
    %v246 = vunpack.c.l.b16 %v175
    %v247 = vunpack.c.l.b16 %v176
    %v248 = vunpack.c.l.b16 %v177
    %v249 = vunpack.c.l.b16 %v178
    %v250 = vpack.c.b16 %v219, %v218
    %v251 = vpack.c.b16 %v221, %v220
    %v252 = vpack.c.b16 %v223, %v222
    %v253 = vpack.c.b16 %v225, %v224
    %v254 = vpack.c.b16 %v227, %v226
    %v255 = vpack.c.b16 %v229, %v228
    %v256 = vpack.c.b16 %v231, %v230
    %v257 = vpack.c.b16 %v233, %v232
    %v258 = vpack.c.b16 %v235, %v234
    %v259 = vpack.c.b16 %v237, %v236
    %v260 = vpack.c.b16 %v239, %v238
    %v261 = vpack.c.b16 %v241, %v240
    %v262 = vpack.c.b16 %v243, %v242
    %v263 = vpack.c.b16 %v245, %v244
    %v264 = vpack.c.b16 %v247, %v246
    %v265 = vpack.c.b16 %v249, %v248
    %282 = vmatprep.subr.bf16.mxu0 0
    %283 = vmatpush1.bf16.msra.mxu0 %v257
    %284 = vmatprep.subr.bf16.mxu0 0
    %285 = vmatpush1.bf16.msra.mxu0 %v256
    %286 = vmatprep.subr.bf16.mxu0 0
    %287 = vmatpush1.bf16.msra.mxu0 %v255
    %288 = vmatprep.subr.bf16.mxu0 0
    %289 = vmatpush1.bf16.msra.mxu0 %v254
    %290 = vmatprep.subr.bf16.mxu0 0
    %291 = vmatpush1.bf16.msra.mxu0 %v253
    %292 = vmatprep.subr.bf16.mxu0 0
    %293 = vmatpush1.bf16.msra.mxu0 %v252
    %294 = vmatprep.subr.bf16.mxu0 0
    %295 = vmatpush1.bf16.msra.mxu0 %v251
    %296 = vmatprep.subr.bf16.mxu0 0
    %297 = vmatpush1.bf16.msra.mxu0 %v250
    %298 = vmatprep.subr.bf16.mxu0 0
    %299 = vmatpush2.bf16.msra.mxu0 %v265
    %300 = vmatprep.subr.bf16.mxu0 0
    %301 = vmatpush2.bf16.msra.mxu0 %v264
    %302 = vmatprep.subr.bf16.mxu0 0
    %303 = vmatpush2.bf16.msra.mxu0 %v263
    %304 = vmatprep.subr.bf16.mxu0 0
    %305 = vmatpush2.bf16.msra.mxu0 %v262
    %306 = vmatprep.subr.bf16.mxu0 0
    %307 = vmatpush2.bf16.msra.mxu0 %v261
    %308 = vmatprep.subr.bf16.mxu0 0
    %309 = vmatpush2.bf16.msra.mxu0 %v260
    %310 = vmatprep.subr.bf16.mxu0 0
    %311 = vmatpush2.bf16.msra.mxu0 %v259
    %312 = vmatprep.subr.bf16.mxu0 0
    %313 = vmatpush2.bf16.msra.mxu0 %v258
    %314 = vmatprep.mubr.bf16.mxu0 %v146
    %315 = vmatmul.mubr.bf16.gmra.mxu0 %v145
    %v316 = vpop.f32.mrf.mxu0
    %v317 = vadd.f32 %v184, %v316
    %v318 = vpop.f32.mrf.mxu0
    %v319 = vpop.f32.mrf.mxu0
    %v320 = vpop.f32.mrf.mxu0
    %321 = vdwg.mxu0
    %322 = vst [vmem:[%s5] sm:$0xff] %v317
    // Predicated region
    $region34: #{_lambda_.1} parent=1 // pred_check
      _
    $region35: #{_lambda_.1} parent=1 // pred_check_branch
      %324 = sbr.rel (0) target = $region37
    $region36: #{_lambda_.1} parent=1 // pred_region
      _
    $region37: #{_lambda_.1} parent=1 // pred_fallthru
      _
    // Predicated region
    $region38: #{_lambda_.1} parent=1 // pred_check
      _
    $region39: #{_lambda_.1} parent=1 // pred_check_branch
      %326 = sbr.rel (0) target = $region41
    $region40: #{_lambda_.1} parent=1 // pred_region
      _
    $region41: #{_lambda_.1} parent=1 // pred_fallthru
      _
    %327 = vsyncpa [#allocation3], 1
    %328 = vsyncpa [#allocation5], 1

</llo_original>
